<compile_context>
chip_gen: v7x
topology: tpu7x:2x2x1
jax: 0.10.0
libtpu: 0.0.40
codegen_flags: <defaults>
</compile_context>

<pallas_src>
import jax
import jax.numpy as jnp
from jax.experimental import pallas as pl
from jax.experimental.pallas import tpu as pltpu

_IN_FEATURES = 64
_HIDDEN = 128
_TILE_M_MAX = 1024  # rows of x per grid step; weights are tiny so only the
                    # x / out tiles scale with tile_m (easily fits VMEM).


def _round_up(x, m):
    return (x + m - 1) // m * m


def chessnet_kernel(x_ref, w1_ref, b1_ref, w2_ref, b2_ref, w3_ref, b3_ref,
                    o_ref):
    # fc1 + ReLU   (bf16 operands, f32 MXU accumulation)
    h1 = jnp.dot(x_ref[...], w1_ref[...], preferred_element_type=jnp.float32)
    h1 = jnp.maximum(h1 + b1_ref[...], 0.0)
    # fc2 + ReLU
    h2 = jnp.dot(h1.astype(jnp.bfloat16), w2_ref[...],
                 preferred_element_type=jnp.float32)
    h2 = jnp.maximum(h2 + b2_ref[...], 0.0)
    # fc3 (zero-padded to N=128 -> lane-dense output tile) + sigmoid
    logits = jnp.dot(h2.astype(jnp.bfloat16), w3_ref[...],
                     preferred_element_type=jnp.float32)
    logits = logits + b3_ref[...]
    # exp -> EUP; approx reciprocal also rides the (otherwise idle) EUP slot.
    o_ref[...] = pl.reciprocal(1.0 + jnp.exp(-logits), approx=True)


@jax.jit
def chessnet_forward(x, w1, b1, w2, b2, w3, b3):
    batch = x.shape[0]

    # Pad fc3 from (128, 1)/(1, 1) to lane-dense (128, 128)/(1, 128).
    # Only column 0 carries real data; the zero columns are sliced off below.
    w3_pad = jnp.zeros((_HIDDEN, _HIDDEN), jnp.float32).at[:, :1].set(w3)
    b3_pad = jnp.zeros((1, _HIDDEN), jnp.float32).at[:, :1].set(b3)

    # bf16 operands for the MXU; cast once here, not per tile. Biases stay f32
    # since they are added to the f32 accumulators.
    x_bf = x.astype(jnp.bfloat16)
    w1_bf = w1.astype(jnp.bfloat16)
    w2_bf = w2.astype(jnp.bfloat16)
    w3_bf = w3_pad.astype(jnp.bfloat16)

    # Batch tiling: tile_m rows per grid step (multiple of 8 for the sublane
    # rule); pad the batch up to a whole number of tiles.
    tile_m = min(_TILE_M_MAX, _round_up(batch, 8))
    b_pad = _round_up(batch, tile_m)
    if b_pad != batch:
        x_bf = jnp.pad(x_bf, ((0, b_pad - batch), (0, 0)))
    num_tiles = b_pad // tile_m

    def resident(shape):
        # Same block index every grid step -> block stays VMEM-resident.
        return pl.BlockSpec(shape, lambda i: tuple(0 for _ in shape))

    out = pl.pallas_call(
        chessnet_kernel,
        out_shape=jax.ShapeDtypeStruct((b_pad, _HIDDEN), jnp.float32),
        grid=(num_tiles,),
        in_specs=[
            pl.BlockSpec((tile_m, _IN_FEATURES), lambda i: (i, 0)),  # x tile
            resident(w1_bf.shape), resident(b1.shape),
            resident(w2_bf.shape), resident(b2.shape),
            resident(w3_bf.shape), resident(b3_pad.shape),
        ],
        out_specs=pl.BlockSpec((tile_m, _HIDDEN), lambda i: (i, 0)),
        compiler_params=pltpu.CompilerParams(
            dimension_semantics=("parallel",)),
    )(x_bf, w1_bf, b1, w2_bf, b2, w3_bf, b3_pad)

    # Strip batch padding and keep only the real fc3 column.
    return out[:batch, :1]


def init_linear_params(key, in_features, out_features):
    # Deterministic init mimicking PyTorch's default: U(-1/sqrt(in), 1/sqrt(in)).
    kw, kb = jax.random.split(key)
    bound = 1.0 / jnp.sqrt(jnp.float32(in_features))
    # Stored as (in, out) so the kernel computes x @ W directly.
    w = jax.random.uniform(kw, (in_features, out_features), jnp.float32,
                           minval=-bound, maxval=bound)
    b = jax.random.uniform(kb, (1, out_features), jnp.float32,
                           minval=-bound, maxval=bound)
    return w, b


if __name__ == "__main__":
    key = jax.random.PRNGKey(0)
    kx, k1, k2, k3 = jax.random.split(key, 4)

    batch = 8
    x = jax.random.normal(kx, (batch, 64), jnp.float32)  # flattened 8x8 board

    w1, b1 = init_linear_params(k1, 64, 128)
    w2, b2 = init_linear_params(k2, 128, 128)
    w3, b3 = init_linear_params(k3, 128, 1)

    out = chessnet_forward(x, w1, b1, w2, b2, w3, b3)
    out = jax.block_until_ready(out)

    # Pure-JAX f32 reference (PyTorch semantics). bf16 operands + approx
    # reciprocal -> loosened tolerance.
    ref = jnp.maximum(x @ w1 + b1, 0.0)
    ref = jnp.maximum(ref @ w2 + b2, 0.0)
    ref = jax.nn.sigmoid(ref @ w3 + b3)

    assert out.shape == (batch, 1)
    assert jnp.allclose(out, ref, atol=3e-2, rtol=3e-2), (
        f"max abs err {jnp.max(jnp.abs(out - ref))}")
    print("KERNEL_OK")
</pallas_src>

<mosaic_0001>
module attributes {stable_mosaic.version = 11 : i64} {
  func.func @chessnet_kernel(%arg0: i32, %arg1: memref<8x64xbf16, #tpu.memory_space<vmem>>, %arg2: memref<64x128xbf16, #tpu.memory_space<vmem>>, %arg3: memref<1x128xf32, #tpu.memory_space<vmem>>, %arg4: memref<128x128xbf16, #tpu.memory_space<vmem>>, %arg5: memref<1x128xf32, #tpu.memory_space<vmem>>, %arg6: memref<128x128xbf16, #tpu.memory_space<vmem>>, %arg7: memref<1x128xf32, #tpu.memory_space<vmem>>, %arg8: memref<8x128xf32, #tpu.memory_space<vmem>>) attributes {dimension_semantics = [#tpu.dimension_semantics<parallel>], iteration_bounds = array<i64: 1>, scalar_prefetch = 0 : i64, scratch_operands = 0 : i64, tpu.core_type = #tpu.core_type<tc>, window_params = [{transform_indices = @transform_0, window_bounds = array<i64: 8, 64>}, {pipeline_mode = #tpu.pipeline_mode<synchronous>, transform_indices = @transform_1, window_bounds = array<i64: 64, 128>}, {pipeline_mode = #tpu.pipeline_mode<synchronous>, transform_indices = @transform_2, window_bounds = array<i64: 1, 128>}, {pipeline_mode = #tpu.pipeline_mode<synchronous>, transform_indices = @transform_3, window_bounds = array<i64: 128, 128>}, {pipeline_mode = #tpu.pipeline_mode<synchronous>, transform_indices = @transform_4, window_bounds = array<i64: 1, 128>}, {pipeline_mode = #tpu.pipeline_mode<synchronous>, transform_indices = @transform_5, window_bounds = array<i64: 128, 128>}, {pipeline_mode = #tpu.pipeline_mode<synchronous>, transform_indices = @transform_6, window_bounds = array<i64: 1, 128>}, {transform_indices = @transform_7, window_bounds = array<i64: 8, 128>}]} {
    %c0 = arith.constant 0 : index
    %c0_0 = arith.constant 0 : index
    %0 = vector.load %arg1[%c0, %c0_0] : memref<8x64xbf16, #tpu.memory_space<vmem>>, vector<8x64xbf16>
    %c0_1 = arith.constant 0 : index
    %c0_2 = arith.constant 0 : index
    %1 = vector.load %arg2[%c0_1, %c0_2] : memref<64x128xbf16, #tpu.memory_space<vmem>>, vector<64x128xbf16>
    %cst = arith.constant dense<0.000000e+00> : vector<8x128xf32>
    %2 = tpu.matmul %0, %1, %cst {dimension_numbers = #tpu.dot_dimension_numbers<[1], [0], [0], [1], [0, 0, 1, 1], [], []>} : vector<8x64xbf16>, vector<64x128xbf16>, vector<8x128xf32> -> vector<8x128xf32>
    %c0_3 = arith.constant 0 : index
    %c0_4 = arith.constant 0 : index
    %3 = vector.load %arg3[%c0_3, %c0_4] : memref<1x128xf32, #tpu.memory_space<vmem>>, vector<1x128xf32>
    %4 = vector.broadcast %3 : vector<1x128xf32> to vector<8x128xf32>
    %5 = arith.addf %2, %4 : vector<8x128xf32>
    %cst_5 = arith.constant 0.000000e+00 : f32
    %6 = vector.broadcast %cst_5 : f32 to vector<8x128xf32>
    %7 = arith.maximumf %5, %6 : vector<8x128xf32>
    %8 = arith.truncf %7 : vector<8x128xf32> to vector<8x128xbf16>
    %c0_6 = arith.constant 0 : index
    %c0_7 = arith.constant 0 : index
    %9 = vector.load %arg4[%c0_6, %c0_7] : memref<128x128xbf16, #tpu.memory_space<vmem>>, vector<128x128xbf16>
    %cst_8 = arith.constant dense<0.000000e+00> : vector<8x128xf32>
    %10 = tpu.matmul %8, %9, %cst_8 {dimension_numbers = #tpu.dot_dimension_numbers<[1], [0], [0], [1], [0, 0, 1, 1], [], []>} : vector<8x128xbf16>, vector<128x128xbf16>, vector<8x128xf32> -> vector<8x128xf32>
    %c0_9 = arith.constant 0 : index
    %c0_10 = arith.constant 0 : index
    %11 = vector.load %arg5[%c0_9, %c0_10] : memref<1x128xf32, #tpu.memory_space<vmem>>, vector<1x128xf32>
    %12 = vector.broadcast %11 : vector<1x128xf32> to vector<8x128xf32>
    %13 = arith.addf %10, %12 : vector<8x128xf32>
    %cst_11 = arith.constant 0.000000e+00 : f32
    %14 = vector.broadcast %cst_11 : f32 to vector<8x128xf32>
    %15 = arith.maximumf %13, %14 : vector<8x128xf32>
    %16 = arith.truncf %15 : vector<8x128xf32> to vector<8x128xbf16>
    %c0_12 = arith.constant 0 : index
    %c0_13 = arith.constant 0 : index
    %17 = vector.load %arg6[%c0_12, %c0_13] : memref<128x128xbf16, #tpu.memory_space<vmem>>, vector<128x128xbf16>
    %cst_14 = arith.constant dense<0.000000e+00> : vector<8x128xf32>
    %18 = tpu.matmul %16, %17, %cst_14 {dimension_numbers = #tpu.dot_dimension_numbers<[1], [0], [0], [1], [0, 0, 1, 1], [], []>} : vector<8x128xbf16>, vector<128x128xbf16>, vector<8x128xf32> -> vector<8x128xf32>
    %c0_15 = arith.constant 0 : index
    %c0_16 = arith.constant 0 : index
    %19 = vector.load %arg7[%c0_15, %c0_16] : memref<1x128xf32, #tpu.memory_space<vmem>>, vector<1x128xf32>
    %20 = vector.broadcast %19 : vector<1x128xf32> to vector<8x128xf32>
    %21 = arith.addf %18, %20 : vector<8x128xf32>
    %cst_17 = arith.constant 0.000000e+00 : f32
    %22 = vector.broadcast %cst_17 : f32 to vector<8x128xf32>
    %23 = arith.subf %22, %21 : vector<8x128xf32>
    %24 = math.exp %23 : vector<8x128xf32>
    %cst_18 = arith.constant 1.000000e+00 : f32
    %25 = vector.broadcast %cst_18 : f32 to vector<8x128xf32>
    %26 = arith.addf %25, %24 : vector<8x128xf32>
    %27 = tpu.reciprocal %26 {approx = true} : vector<8x128xf32> -> vector<8x128xf32>
    %c0_19 = arith.constant 0 : index
    %c0_20 = arith.constant 0 : index
    %28 = vector.load %arg8[%c0_19, %c0_20] : memref<8x128xf32, #tpu.memory_space<vmem>>, vector<8x128xf32>
    tpu.vector_store %arg8[%c0_19, %c0_20], %27 {strides = array<i32>} : memref<8x128xf32, #tpu.memory_space<vmem>>, vector<8x128xf32>,
    return
  }
  func.func @transform_0(%arg0: i32) -> (i32, i32) {
    %c0_i32 = arith.constant 0 : i32
    %c0_i32_0 = arith.constant 0 : i32
    return %arg0, %c0_i32 : i32, i32
  }
  func.func @transform_1(%arg0: i32) -> (i32, i32) {
    %c0_i32 = arith.constant 0 : i32
    %c0_i32_0 = arith.constant 0 : i32
    %c0_i32_1 = arith.constant 0 : i32
    return %c0_i32, %c0_i32_0 : i32, i32
  }
  func.func @transform_2(%arg0: i32) -> (i32, i32) {
    %c0_i32 = arith.constant 0 : i32
    %c0_i32_0 = arith.constant 0 : i32
    %c0_i32_1 = arith.constant 0 : i32
    return %c0_i32, %c0_i32_0 : i32, i32
  }
  func.func @transform_3(%arg0: i32) -> (i32, i32) {
    %c0_i32 = arith.constant 0 : i32
    %c0_i32_0 = arith.constant 0 : i32
    %c0_i32_1 = arith.constant 0 : i32
    return %c0_i32, %c0_i32_0 : i32, i32
  }
  func.func @transform_4(%arg0: i32) -> (i32, i32) {
    %c0_i32 = arith.constant 0 : i32
    %c0_i32_0 = arith.constant 0 : i32
    %c0_i32_1 = arith.constant 0 : i32
    return %c0_i32, %c0_i32_0 : i32, i32
  }
  func.func @transform_5(%arg0: i32) -> (i32, i32) {
    %c0_i32 = arith.constant 0 : i32
    %c0_i32_0 = arith.constant 0 : i32
    %c0_i32_1 = arith.constant 0 : i32
    return %c0_i32, %c0_i32_0 : i32, i32
  }
  func.func @transform_6(%arg0: i32) -> (i32, i32) {
    %c0_i32 = arith.constant 0 : i32
    %c0_i32_0 = arith.constant 0 : i32
    %c0_i32_1 = arith.constant 0 : i32
    return %c0_i32, %c0_i32_0 : i32, i32
  }
  func.func @transform_7(%arg0: i32) -> (i32, i32) {
    %c0_i32 = arith.constant 0 : i32
    %c0_i32_0 = arith.constant 0 : i32
    return %arg0, %c0_i32 : i32, i32
  }
}

</mosaic_0001>

<llo_original>
// kernel: chessnet_forward.1
$region0: #{chessnet_forward.1}
  #allocation0 [shape = 'u32[]', space=smem, size = 0x4, offset = 0x4, fixed_abs, tag = 'smem constant byte address 0x4 - core index']
  #allocation1 [shape = 'u32[144,128]{1,0:T(1,128)}', space=vmem, size = 0x12000, scoped, tag = 'internal scratch']
  %s0 = inlined_call_operand.vmem [shape: bf16[8,64], index: 0, kind: input, shape index: {}]
  %s1 = inlined_call_operand.vmem [shape: bf16[64,128], index: 1, kind: input, shape index: {}]
  %s2 = inlined_call_operand.vmem [shape: f32[1,128], index: 2, kind: input, shape index: {}]
  %s3 = inlined_call_operand.vmem [shape: bf16[128,128], index: 3, kind: input, shape index: {}]
  %s4 = inlined_call_operand.vmem [shape: f32[1,128], index: 4, kind: input, shape index: {}]
  %s5 = inlined_call_operand.vmem [shape: bf16[128,128], index: 5, kind: input, shape index: {}]
  %s6 = inlined_call_operand.vmem [shape: f32[1,128], index: 6, kind: input, shape index: {}]
  %s7 = inlined_call_operand.vmem [shape: f32[8,128], index: 7, kind: output, shape index: {}]
  %s8 = sld [smem:[#allocation0]]
  $region38: #{chessnet_forward.1} parent=0
    _
  %s10 = ssub.s32 1, %s8
  %s11 = scalar_select 0, %s10, %s8
  // Predicated region
  $region2: #{chessnet_forward.1} parent=0 // pred_check
    _
  $region3: #{chessnet_forward.1} parent=0 // pred_check_branch
    %13 = sbr.rel (0) target = $region5
  $region4: #{chessnet_forward.1} parent=0 // pred_region
    _
  $region5: #{chessnet_forward.1} parent=0 // pred_fallthru
    _
  // Predicated region
  $region6: #{chessnet_forward.1} parent=0 // pred_check
    _
  $region7: #{chessnet_forward.1} parent=0 // pred_check_branch
    %15 = sbr.rel (0) target = $region9
  $region8: #{chessnet_forward.1} parent=0 // pred_region
    _
  $region9: #{chessnet_forward.1} parent=0 // pred_fallthru
    _
  // Predicated region
  $region10: #{chessnet_forward.1} parent=0 // pred_check
    _
  $region11: #{chessnet_forward.1} parent=0 // pred_check_branch
    %17 = sbr.rel (0) target = $region13
  $region12: #{chessnet_forward.1} parent=0 // pred_region
    _
  $region13: #{chessnet_forward.1} parent=0 // pred_fallthru
    _
  // Predicated region
  $region14: #{chessnet_forward.1} parent=0 // pred_check
    _
  $region15: #{chessnet_forward.1} parent=0 // pred_check_branch
    %19 = sbr.rel (0) target = $region17
  $region16: #{chessnet_forward.1} parent=0 // pred_region
    _
  $region17: #{chessnet_forward.1} parent=0 // pred_fallthru
    _
  // Predicated region
  $region18: #{chessnet_forward.1} parent=0 // pred_check
    _
  $region19: #{chessnet_forward.1} parent=0 // pred_check_branch
    %21 = sbr.rel (0) target = $region21
  $region20: #{chessnet_forward.1} parent=0 // pred_region
    _
  $region21: #{chessnet_forward.1} parent=0 // pred_fallthru
    _
  // Predicated region
  $region22: #{chessnet_forward.1} parent=0 // pred_check
    _
  $region23: #{chessnet_forward.1} parent=0 // pred_check_branch
    %23 = sbr.rel (0) target = $region25
  $region24: #{chessnet_forward.1} parent=0 // pred_region
    _
  $region25: #{chessnet_forward.1} parent=0 // pred_fallthru
    _
  // Predicated region
  $region26: #{chessnet_forward.1} parent=0 // pred_check
    _
  $region27: #{chessnet_forward.1} parent=0 // pred_check_branch
    %25 = sbr.rel (0) target = $region29
  $region28: #{chessnet_forward.1} parent=0 // pred_region
    _
  $region29: #{chessnet_forward.1} parent=0 // pred_fallthru
    _
  %v27 = vld [vmem:[%s0] sm:$0xf]
  %v28 = vld [vmem:[%s1] sm:$0xf]
  %v29 = vld [vmem:[%s1 + $0x4] sm:$0xf]
  %v30 = vld [vmem:[%s1 + $0x8] sm:$0xf]
  %v31 = vld [vmem:[%s1 + $0xc] sm:$0xf]
  %v32 = vld [vmem:[%s1 + $0x10] sm:$0xf]
  %v33 = vld [vmem:[%s1 + $0x14] sm:$0xf]
  %v34 = vld [vmem:[%s1 + $0x18] sm:$0xf]
  %v35 = vld [vmem:[%s1 + $0x1c] sm:$0xf]
  %v36 = vld [vmem:[%s2] sm:$0x1]
  %v38 = vlaneseq
  %v39 = vshrl.u32 %v38, 7
  %v40 = vsub.s32 0, %v39
  %v41 = vrot.slane %v36, %v40
  %v51 = vunpack.c.l.b16 %v28
  %v52 = vunpack.c.l.b16 %v29
  %v53 = vunpack.c.l.b16 %v30
  %v54 = vunpack.c.l.b16 %v31
  %v55 = vunpack.c.l.b16 %v32
  %v56 = vunpack.c.l.b16 %v33
  %v57 = vunpack.c.l.b16 %v34
  %v58 = vunpack.c.l.b16 %v35
  %v59 = vpack.c.b16 %v52, %v51
  %v60 = vpack.c.b16 %v54, %v53
  %v61 = vpack.c.b16 %v56, %v55
  %v62 = vpack.c.b16 %v58, %v57
  %vm67 = vcmask 523264
  %v69 = vsel %vm67, %v27, 0
  %71 = vmatprep.subr.bf16.mxu0 0
  %72 = vmatpush1.bf16.msra.mxu0 %v59
  %73 = vmatprep.subr.bf16.mxu0 0
  %74 = vmatpush1.bf16.msra.mxu0 %v60
  %75 = vmatprep.subr.bf16.mxu0 0
  %76 = vmatpush1.bf16.msra.mxu0 %v61
  %77 = vmatprep.subr.bf16.mxu0 0
  %78 = vmatpush1.bf16.msra.mxu0 %v62
  %79 = vmatprep.subr.bf16.mxu0 0
  %80 = vmatpush1.bf16.msra.mxu0 0
  %81 = vmatprep.subr.bf16.mxu0 0
  %82 = vmatpush1.bf16.msra.mxu0 0
  %83 = vmatprep.subr.bf16.mxu0 0
  %84 = vmatpush1.bf16.msra.mxu0 0
  %85 = vmatprep.subr.bf16.mxu0 0
  %86 = vmatpush1.bf16.msra.mxu0 0
  %87 = vmatprep.subr.bf16.mxu0 0
  %88 = vmatpush1.bf16.msra.mxu0 0
  %89 = vmatprep.subr.bf16.mxu0 0
  %90 = vmatpush1.bf16.msra.mxu0 0
  %91 = vmatprep.subr.bf16.mxu0 0
  %92 = vmatpush1.bf16.msra.mxu0 0
  %93 = vmatprep.subr.bf16.mxu0 0
  %94 = vmatpush1.bf16.msra.mxu0 0
  %95 = vmatprep.subr.bf16.mxu0 0
  %96 = vmatpush1.bf16.msra.mxu0 0
  %97 = vmatprep.subr.bf16.mxu0 0
  %98 = vmatpush1.bf16.msra.mxu0 0
  %99 = vmatprep.subr.bf16.mxu0 0
  %100 = vmatpush1.bf16.msra.mxu0 0
  %101 = vmatprep.subr.bf16.mxu0 0
  %102 = vmatpush1.bf16.msra.mxu0 0
  %103 = vmatprep.mubr.bf16.mxu0 0
  %104 = vmatmul.mubr.bf16.gmra.mrb[0].mxu0 %v69
  %v105 = vpop.f32.mrb[0].mxu0
  %v106 = vadd.f32 %v41, %v105
  %v107 = vpop.f32.mrb[0].mxu0
  %v108 = vpop.f32.mrb[0].mxu0
  %v109 = vpop.f32.mrb[0].mxu0
  %110 = vdwg.mxu0
  %v111 = vmax.f32 %v106, 0.0
  %v112 = vpack.c.bf16 %v111, %v111
  %v113 = vld [vmem:[%s3] sm:$0xf]
  %v114 = vld [vmem:[%s3 + $0x4] sm:$0xf]
  %v115 = vld [vmem:[%s3 + $0x8] sm:$0xf]
  %v116 = vld [vmem:[%s3 + $0xc] sm:$0xf]
  %v117 = vld [vmem:[%s3 + $0x10] sm:$0xf]
  %v118 = vld [vmem:[%s3 + $0x14] sm:$0xf]
  %v119 = vld [vmem:[%s3 + $0x18] sm:$0xf]
  %v120 = vld [vmem:[%s3 + $0x1c] sm:$0xf]
  %v121 = vld [vmem:[%s3 + $0x20] sm:$0xf]
  %v122 = vld [vmem:[%s3 + $0x24] sm:$0xf]
  %v123 = vld [vmem:[%s3 + $0x28] sm:$0xf]
  %v124 = vld [vmem:[%s3 + $0x2c] sm:$0xf]
  %v125 = vld [vmem:[%s3 + $0x30] sm:$0xf]
  %v126 = vld [vmem:[%s3 + $0x34] sm:$0xf]
  %v127 = vld [vmem:[%s3 + $0x38] sm:$0xf]
  %v128 = vld [vmem:[%s3 + $0x3c] sm:$0xf]
  %v129 = vld [vmem:[%s4] sm:$0x1]
  %v131 = vlaneseq
  %v132 = vshrl.u32 %v131, 7
  %v133 = vsub.s32 0, %v132
  %v134 = vrot.slane %v129, %v133
  %v152 = vunpack.c.l.b16 %v113
  %v153 = vunpack.c.l.b16 %v114
  %v154 = vunpack.c.l.b16 %v115
  %v155 = vunpack.c.l.b16 %v116
  %v156 = vunpack.c.l.b16 %v117
  %v157 = vunpack.c.l.b16 %v118
  %v158 = vunpack.c.l.b16 %v119
  %v159 = vunpack.c.l.b16 %v120
  %v160 = vunpack.c.l.b16 %v121
  %v161 = vunpack.c.l.b16 %v122
  %v162 = vunpack.c.l.b16 %v123
  %v163 = vunpack.c.l.b16 %v124
  %v164 = vunpack.c.l.b16 %v125
  %v165 = vunpack.c.l.b16 %v126
  %v166 = vunpack.c.l.b16 %v127
  %v167 = vunpack.c.l.b16 %v128
  %v168 = vpack.c.b16 %v153, %v152
  %v169 = vpack.c.b16 %v155, %v154
  %v170 = vpack.c.b16 %v157, %v156
  %v171 = vpack.c.b16 %v159, %v158
  %v172 = vpack.c.b16 %v161, %v160
  %v173 = vpack.c.b16 %v163, %v162
  %v174 = vpack.c.b16 %v165, %v164
  %v175 = vpack.c.b16 %v167, %v166
  %184 = vmatprep.subr.bf16.mxu0 0
  %185 = vmatpush1.bf16.msra.mxu0 %v168
  %186 = vmatprep.subr.bf16.mxu0 0
  %187 = vmatpush1.bf16.msra.mxu0 %v169
  %188 = vmatprep.subr.bf16.mxu0 0
  %189 = vmatpush1.bf16.msra.mxu0 %v170
  %190 = vmatprep.subr.bf16.mxu0 0
  %191 = vmatpush1.bf16.msra.mxu0 %v171
  %192 = vmatprep.subr.bf16.mxu0 0
  %193 = vmatpush1.bf16.msra.mxu0 %v172
  %194 = vmatprep.subr.bf16.mxu0 0
  %195 = vmatpush1.bf16.msra.mxu0 %v173
  %196 = vmatprep.subr.bf16.mxu0 0
  %197 = vmatpush1.bf16.msra.mxu0 %v174
  %198 = vmatprep.subr.bf16.mxu0 0
  %199 = vmatpush1.bf16.msra.mxu0 %v175
  %200 = vmatprep.subr.bf16.mxu0 0
  %201 = vmatpush1.bf16.msra.mxu0 0
  %202 = vmatprep.subr.bf16.mxu0 0
  %203 = vmatpush1.bf16.msra.mxu0 0
  %204 = vmatprep.subr.bf16.mxu0 0
  %205 = vmatpush1.bf16.msra.mxu0 0
  %206 = vmatprep.subr.bf16.mxu0 0
  %207 = vmatpush1.bf16.msra.mxu0 0
  %208 = vmatprep.subr.bf16.mxu0 0
  %209 = vmatpush1.bf16.msra.mxu0 0
  %210 = vmatprep.subr.bf16.mxu0 0
  %211 = vmatpush1.bf16.msra.mxu0 0
  %212 = vmatprep.subr.bf16.mxu0 0
  %213 = vmatpush1.bf16.msra.mxu0 0
  %214 = vmatprep.subr.bf16.mxu0 0
  %215 = vmatpush1.bf16.msra.mxu0 0
  %216 = vmatprep.mubr.bf16.mxu0 0
  %217 = vmatmul.mubr.bf16.gmra.mrb[0].mxu0 %v112
  %v218 = vpop.f32.mrb[0].mxu0
  %v219 = vadd.f32 %v134, %v218
  %v220 = vpop.f32.mrb[0].mxu0
  %v221 = vpop.f32.mrb[0].mxu0
  %v222 = vpop.f32.mrb[0].mxu0
  %223 = vdwg.mxu0
  %v224 = vmax.f32 %v219, 0.0
  %v225 = vpack.c.bf16 %v224, %v224
  %v226 = vld [vmem:[%s5] sm:$0xf]
  %v227 = vld [vmem:[%s5 + $0x4] sm:$0xf]
  %v228 = vld [vmem:[%s5 + $0x8] sm:$0xf]
  %v229 = vld [vmem:[%s5 + $0xc] sm:$0xf]
  %v230 = vld [vmem:[%s5 + $0x10] sm:$0xf]
  %v231 = vld [vmem:[%s5 + $0x14] sm:$0xf]
  %v232 = vld [vmem:[%s5 + $0x18] sm:$0xf]
  %v233 = vld [vmem:[%s5 + $0x1c] sm:$0xf]
  %v234 = vld [vmem:[%s5 + $0x20] sm:$0xf]
  %v235 = vld [vmem:[%s5 + $0x24] sm:$0xf]
  %v236 = vld [vmem:[%s5 + $0x28] sm:$0xf]
  %v237 = vld [vmem:[%s5 + $0x2c] sm:$0xf]
  %v238 = vld [vmem:[%s5 + $0x30] sm:$0xf]
  %v239 = vld [vmem:[%s5 + $0x34] sm:$0xf]
  %v240 = vld [vmem:[%s5 + $0x38] sm:$0xf]
  %v241 = vld [vmem:[%s5 + $0x3c] sm:$0xf]
  %v242 = vld [vmem:[%s6] sm:$0x1]
  %v244 = vlaneseq
  %v245 = vshrl.u32 %v244, 7
  %v246 = vsub.s32 0, %v245
  %v247 = vrot.slane %v242, %v246
  %v265 = vunpack.c.l.b16 %v226
  %v266 = vunpack.c.l.b16 %v227
  %v267 = vunpack.c.l.b16 %v228
  %v268 = vunpack.c.l.b16 %v229
  %v269 = vunpack.c.l.b16 %v230
  %v270 = vunpack.c.l.b16 %v231
  %v271 = vunpack.c.l.b16 %v232
  %v272 = vunpack.c.l.b16 %v233
  %v273 = vunpack.c.l.b16 %v234
  %v274 = vunpack.c.l.b16 %v235
  %v275 = vunpack.c.l.b16 %v236
  %v276 = vunpack.c.l.b16 %v237
  %v277 = vunpack.c.l.b16 %v238
  %v278 = vunpack.c.l.b16 %v239
  %v279 = vunpack.c.l.b16 %v240
  %v280 = vunpack.c.l.b16 %v241
  %v281 = vpack.c.b16 %v266, %v265
  %v282 = vpack.c.b16 %v268, %v267
  %v283 = vpack.c.b16 %v270, %v269
  %v284 = vpack.c.b16 %v272, %v271
  %v285 = vpack.c.b16 %v274, %v273
  %v286 = vpack.c.b16 %v276, %v275
  %v287 = vpack.c.b16 %v278, %v277
  %v288 = vpack.c.b16 %v280, %v279
  %297 = vmatprep.subr.bf16.mxu0 0
  %298 = vmatpush1.bf16.msra.mxu0 %v281
  %299 = vmatprep.subr.bf16.mxu0 0
  %300 = vmatpush1.bf16.msra.mxu0 %v282
  %301 = vmatprep.subr.bf16.mxu0 0
  %302 = vmatpush1.bf16.msra.mxu0 %v283
  %303 = vmatprep.subr.bf16.mxu0 0
  %304 = vmatpush1.bf16.msra.mxu0 %v284
  %305 = vmatprep.subr.bf16.mxu0 0
  %306 = vmatpush1.bf16.msra.mxu0 %v285
  %307 = vmatprep.subr.bf16.mxu0 0
  %308 = vmatpush1.bf16.msra.mxu0 %v286
  %309 = vmatprep.subr.bf16.mxu0 0
  %310 = vmatpush1.bf16.msra.mxu0 %v287
  %311 = vmatprep.subr.bf16.mxu0 0
  %312 = vmatpush1.bf16.msra.mxu0 %v288
  %313 = vmatprep.subr.bf16.mxu0 0
  %314 = vmatpush1.bf16.msra.mxu0 0
  %315 = vmatprep.subr.bf16.mxu0 0
  %316 = vmatpush1.bf16.msra.mxu0 0
  %317 = vmatprep.subr.bf16.mxu0 0
  %318 = vmatpush1.bf16.msra.mxu0 0
  %319 = vmatprep.subr.bf16.mxu0 0
  %320 = vmatpush1.bf16.msra.mxu0 0
  %321 = vmatprep.subr.bf16.mxu0 0
  %322 = vmatpush1.bf16.msra.mxu0 0
  %323 = vmatprep.subr.bf16.mxu0 0
  %324 = vmatpush1.bf16.msra.mxu0 0
  %325 = vmatprep.subr.bf16.mxu0 0
  %326 = vmatpush1.bf16.msra.mxu0 0
  %327 = vmatprep.subr.bf16.mxu0 0
  %328 = vmatpush1.bf16.msra.mxu0 0
  %329 = vmatprep.mubr.bf16.mxu0 0
  %330 = vmatmul.mubr.bf16.gmra.mrb[0].mxu0 %v225
  %v331 = vpop.f32.mrb[0].mxu0
  %v332 = vadd.f32 %v247, %v331
  %v333 = vpop.f32.mrb[0].mxu0
  %v334 = vpop.f32.mrb[0].mxu0
  %v335 = vpop.f32.mrb[0].mxu0
  %336 = vdwg.mxu0
  %v337 = vsub.f32 0.0, %v332
  %v338 = vmul.f32 %v337, 1.442695
  %v339 = vpow.pop %v338
  %v340 = vadd.f32 %v339, 1.0
  %v341 = vrcp.pop %v340
  %342 = vst [vmem:[%s7] sm:$0xff] %v341
  // Predicated region
  $region30: #{chessnet_forward.1} parent=0 // pred_check
    _
  $region31: #{chessnet_forward.1} parent=0 // pred_check_branch
    %344 = sbr.rel (0) target = $region33
  $region32: #{chessnet_forward.1} parent=0 // pred_region
    _
  $region33: #{chessnet_forward.1} parent=0 // pred_fallthru
    _
  // Predicated region
  $region34: #{chessnet_forward.1} parent=0 // pred_check
    _
  $region35: #{chessnet_forward.1} parent=0 // pred_check_branch
    %346 = sbr.rel (0) target = $region37
  $region36: #{chessnet_forward.1} parent=0 // pred_region
    _
  $region37: #{chessnet_forward.1} parent=0 // pred_fallthru
    _

</llo_original>
